<compile_context>
chip_gen: v7x
topology: tpu7x:2x2x1
jax: 0.10.0
libtpu: 0.0.40
codegen_flags: <defaults>
</compile_context>

<pallas_src>
import functools

import jax
import jax.numpy as jnp
from jax.experimental import pallas as pl
from jax.experimental.pallas import tpu as pltpu

_LANE = 128
_LN_EPS = 1e-5


def _round_up(n, m):
    return (n + m - 1) // m * m


def _patch_embed_kernel(p_ref, w_ref, b_ref, g_ref, beta_ref, o_ref, *, e_real):
    # p_ref:   (tm, Kp)   im2col patch rows (zero-padded K columns), bf16/f32
    # w_ref:   (Kp, Ep)   conv weight as a matmul operand (zero-padded), bf16/f32
    # b_ref/g_ref/beta_ref: (1, Ep)  f32 conv bias / LN gamma / LN beta (zero-padded)
    # o_ref:   (tm, Ep)   lane-dense output slab; wrapper slices [:, :e_real]
    y = jnp.dot(p_ref[...], w_ref[...], preferred_element_type=jnp.float32)
    y = y + b_ref[...]

    # LayerNorm over the *real* embed_dim only (padded lanes masked out of the
    # statistics).  Biased variance, eps=1e-5, matching nn.LayerNorm.
    col = jax.lax.broadcasted_iota(jnp.int32, y.shape, dimension=1)
    valid = col < e_real
    inv_e = 1.0 / float(e_real)
    mean = jnp.sum(jnp.where(valid, y, 0.0), axis=-1, keepdims=True) * inv_e
    diff = jnp.where(valid, y - mean, 0.0)
    var = jnp.sum(diff * diff, axis=-1, keepdims=True) * inv_e
    # Fold gamma into a single scale (one fewer full-tile VPU pass).
    scale = g_ref[...] * jax.lax.rsqrt(var + _LN_EPS)
    o_ref[...] = ((y - mean) * scale + beta_ref[...]).astype(o_ref.dtype)


def _im2col(x, kh, kw, stride, pad_h, pad_w):
    """x: (B, C, H, W) -> patches (B*Hout*Wout, C*kh*kw), ordered (C, kh, kw)."""
    B, C, H, W = x.shape
    xp = jnp.pad(x, ((0, 0), (0, 0), (pad_h, pad_h), (pad_w, pad_w)))
    Hp, Wp = H + 2 * pad_h, W + 2 * pad_w
    Hout = (Hp - kh) // stride + 1
    Wout = (Wp - kw) // stride + 1
    slabs = []
    for di in range(kh):
        for dj in range(kw):
            slabs.append(
                xp[:, :, di:di + stride * Hout:stride, dj:dj + stride * Wout:stride])
    stk = jnp.stack(slabs, axis=0)                 # (kh*kw, B, C, Hout, Wout)
    stk = jnp.transpose(stk, (1, 3, 4, 2, 0))      # (B, Hout, Wout, C, kh*kw)
    return stk.reshape(B * Hout * Wout, C * kh * kw), Hout, Wout


@functools.partial(jax.jit,
                   static_argnames=("patch_size", "stride", "tm", "compute_dtype"))
def overlap_patch_embed(x, w_conv, b_conv, ln_gamma, ln_beta, *,
                        patch_size, stride, tm=256,
                        compute_dtype=jnp.bfloat16):
    """x: (B, C, H, W) NCHW.  Returns (tokens (B, Hout*Wout, E), Hout, Wout)."""
    B, C, H, W = x.shape
    E = w_conv.shape[0]
    kh = kw = patch_size
    pad = patch_size // 2

    # im2col in the wrapper; cast to bf16 first so the dominant (M, K) patch
    # stream is half-width in HBM.  The dot still accumulates in f32.
    # TODO(synk): fuse the patch gather into the kernel (conv-as-sum-of-matmuls
    # reading the padded NHWC image directly) to drop the ~3x duplicated
    # im2col HBM round-trip; worthwhile for the later, larger-C PVT stages.
    patches, Hout, Wout = _im2col(x.astype(compute_dtype), kh, kw, stride, pad, pad)
    M, Kdim = patches.shape

    Kp = _round_up(Kdim, _LANE)        # lane-aligned contraction dim
    Ep = _round_up(E, _LANE)           # lane-dense output dim (unmasked vst)
    Mp = _round_up(M, tm)              # token rows padded to the tile

    patches_p = jnp.pad(patches, ((0, Mp - M), (0, Kp - Kdim)))
    w_mat = jnp.pad(w_conv.reshape(E, Kdim).T.astype(compute_dtype),
                    ((0, Kp - Kdim), (0, Ep - E)))
    b_row = jnp.pad(b_conv.astype(jnp.float32).reshape(1, E), ((0, 0), (0, Ep - E)))
    g_row = jnp.pad(ln_gamma.astype(jnp.float32).reshape(1, E), ((0, 0), (0, Ep - E)))
    beta_row = jnp.pad(ln_beta.astype(jnp.float32).reshape(1, E), ((0, 0), (0, Ep - E)))

    kernel = functools.partial(_patch_embed_kernel, e_real=E)
    out = pl.pallas_call(
        kernel,
        out_shape=jax.ShapeDtypeStruct((Mp, Ep), x.dtype),
        grid_spec=pltpu.PrefetchScalarGridSpec(
            num_scalar_prefetch=0,
            grid=(Mp // tm,),
            in_specs=[
                pl.BlockSpec((tm, Kp), lambda i: (i, 0)),   # patch rows (streamed)
                pl.BlockSpec((Kp, Ep), lambda i: (0, 0)),   # weight (resident)
                pl.BlockSpec((1, Ep), lambda i: (0, 0)),    # conv bias
                pl.BlockSpec((1, Ep), lambda i: (0, 0)),    # LN gamma
                pl.BlockSpec((1, Ep), lambda i: (0, 0)),    # LN beta
            ],
            out_specs=pl.BlockSpec((tm, Ep), lambda i: (i, 0)),
        ),
        compiler_params=pltpu.CompilerParams(
            # Single token axis stays parallel so it shards across both
            # TensorCores on v7x megacore.
            dimension_semantics=("parallel",)),
    )(patches_p, w_mat, b_row, g_row, beta_row)

    tokens = out[:M, :E].reshape(B, Hout * Wout, E)
    return tokens, Hout, Wout


def _reference(x, w, b, g, beta, patch_size, stride):
    """Pure-JAX f32 reference matching the PyTorch module."""
    pad = patch_size // 2
    y = jax.lax.conv_general_dilated(
        x, w, window_strides=(stride, stride),
        padding=((pad, pad), (pad, pad)),
        dimension_numbers=("NCHW", "OIHW", "NCHW"))
    y = y + b[None, :, None, None]
    B, E, Ho, Wo = y.shape
    t = jnp.transpose(y.reshape(B, E, Ho * Wo), (0, 2, 1))
    mu = jnp.mean(t, axis=-1, keepdims=True)
    var = jnp.mean((t - mu) ** 2, axis=-1, keepdims=True)
    return (t - mu) * jax.lax.rsqrt(var + _LN_EPS) * g + beta, Ho, Wo


if __name__ == "__main__":
    # Small shapes consistent with the module's forward:
    # img_size=16, patch_size=7, stride=4, in_chans=4, embed_dim=32, batch=2
    B, C, H, W = 2, 4, 16, 16
    patch_size, stride, embed_dim = 7, 4, 32

    key = jax.random.PRNGKey(0)
    kx, kw_, kb, kg, kbe = jax.random.split(key, 5)

    x = jax.random.normal(kx, (B, C, H, W), dtype=jnp.float32)
    # nn.Conv2d weight (E, C, kh, kw), bias (E,)
    w_conv = jax.random.normal(kw_, (embed_dim, C, patch_size, patch_size),
                               dtype=jnp.float32) * 0.05
    b_conv = jax.random.normal(kb, (embed_dim,), dtype=jnp.float32) * 0.05
    # nn.LayerNorm params (deterministic, slightly perturbed from defaults)
    ln_gamma = jnp.ones((embed_dim,), jnp.float32) + 0.01 * jax.random.normal(
        kg, (embed_dim,), dtype=jnp.float32)
    ln_beta = 0.01 * jax.random.normal(kbe, (embed_dim,), dtype=jnp.float32)

    tokens, Hout, Wout = overlap_patch_embed(
        x, w_conv, b_conv, ln_gamma, ln_beta,
        patch_size=patch_size, stride=stride)
    jax.block_until_ready(tokens)

    assert tokens.shape == (B, Hout * Wout, embed_dim), tokens.shape

    ref, Hr, Wr = _reference(x, w_conv, b_conv, ln_gamma, ln_beta,
                             patch_size, stride)
    assert (Hout, Wout) == (Hr, Wr), ((Hout, Wout), (Hr, Wr))
    err = float(jnp.max(jnp.abs(tokens.astype(jnp.float32) - ref)))
    # bf16 inputs with f32 MXU accumulation + f32 LayerNorm -> loose tolerance.
    assert err < 0.15, f"max abs err {err}"

    print("KERNEL_OK")
</pallas_src>

<mosaic_0001>
module attributes {stable_mosaic.version = 11 : i64} {
  func.func @_patch_embed_kernel(%arg0: i32, %arg1: memref<256x256xbf16, #tpu.memory_space<vmem>>, %arg2: memref<256x128xbf16, #tpu.memory_space<vmem>>, %arg3: memref<1x128xf32, #tpu.memory_space<vmem>>, %arg4: memref<1x128xf32, #tpu.memory_space<vmem>>, %arg5: memref<1x128xf32, #tpu.memory_space<vmem>>, %arg6: memref<256x128xf32, #tpu.memory_space<vmem>>) attributes {dimension_semantics = [#tpu.dimension_semantics<parallel>], iteration_bounds = array<i64: 1>, scalar_prefetch = 0 : i64, scratch_operands = 0 : i64, tpu.core_type = #tpu.core_type<tc>, window_params = [{transform_indices = @transform_0, window_bounds = array<i64: 256, 256>}, {pipeline_mode = #tpu.pipeline_mode<synchronous>, transform_indices = @transform_1, window_bounds = array<i64: 256, 128>}, {pipeline_mode = #tpu.pipeline_mode<synchronous>, transform_indices = @transform_2, window_bounds = array<i64: 1, 128>}, {pipeline_mode = #tpu.pipeline_mode<synchronous>, transform_indices = @transform_3, window_bounds = array<i64: 1, 128>}, {pipeline_mode = #tpu.pipeline_mode<synchronous>, transform_indices = @transform_4, window_bounds = array<i64: 1, 128>}, {transform_indices = @transform_5, window_bounds = array<i64: 256, 128>}]} {
    %c0 = arith.constant 0 : index
    %c0_0 = arith.constant 0 : index
    %0 = vector.load %arg1[%c0, %c0_0] : memref<256x256xbf16, #tpu.memory_space<vmem>>, vector<256x256xbf16>
    %c0_1 = arith.constant 0 : index
    %c0_2 = arith.constant 0 : index
    %1 = vector.load %arg2[%c0_1, %c0_2] : memref<256x128xbf16, #tpu.memory_space<vmem>>, vector<256x128xbf16>
    %cst = arith.constant dense<0.000000e+00> : vector<256x128xf32>
    %2 = tpu.matmul %0, %1, %cst {dimension_numbers = #tpu.dot_dimension_numbers<[1], [0], [0], [1], [0, 0, 1, 1], [], []>} : vector<256x256xbf16>, vector<256x128xbf16>, vector<256x128xf32> -> vector<256x128xf32>
    %c0_3 = arith.constant 0 : index
    %c0_4 = arith.constant 0 : index
    %3 = vector.load %arg3[%c0_3, %c0_4] : memref<1x128xf32, #tpu.memory_space<vmem>>, vector<1x128xf32>
    %4 = vector.broadcast %3 : vector<1x128xf32> to vector<256x128xf32>
    %5 = arith.addf %2, %4 : vector<256x128xf32>
    %6 = tpu.iota {dimensions = array<i32: 1>} : vector<256x128xi32>
    %c32_i32 = arith.constant 32 : i32
    %7 = vector.broadcast %c32_i32 : i32 to vector<256x128xi32>
    %8 = arith.cmpi slt, %6, %7 : vector<256x128xi32>
    %cst_5 = arith.constant 0.000000e+00 : f32
    %9 = vector.broadcast %cst_5 : f32 to vector<256x128xf32>
    %10 = arith.select %8, %5, %9 : vector<256x128xi1>, vector<256x128xf32>
    %cst_6 = arith.constant dense<0.000000e+00> : vector<256xf32>
    %11 = vector.multi_reduction <add>, %10, %cst_6 [1] : vector<256x128xf32> to vector<256xf32>
    %12 = vector.shape_cast %11 : vector<256xf32> to vector<256x1xf32>
    %cst_7 = arith.constant 3.125000e-02 : f32
    %13 = vector.broadcast %cst_7 : f32 to vector<256x1xf32>
    %14 = arith.mulf %12, %13 : vector<256x1xf32>
    %15 = vector.broadcast %14 : vector<256x1xf32> to vector<256x128xf32>
    %16 = arith.subf %5, %15 : vector<256x128xf32>
    %cst_8 = arith.constant 0.000000e+00 : f32
    %17 = vector.broadcast %cst_8 : f32 to vector<256x128xf32>
    %18 = arith.select %8, %16, %17 : vector<256x128xi1>, vector<256x128xf32>
    %19 = arith.mulf %18, %18 : vector<256x128xf32>
    %cst_9 = arith.constant dense<0.000000e+00> : vector<256xf32>
    %20 = vector.multi_reduction <add>, %19, %cst_9 [1] : vector<256x128xf32> to vector<256xf32>
    %21 = vector.shape_cast %20 : vector<256xf32> to vector<256x1xf32>
    %cst_10 = arith.constant 3.125000e-02 : f32
    %22 = vector.broadcast %cst_10 : f32 to vector<256x1xf32>
    %23 = arith.mulf %21, %22 : vector<256x1xf32>
    %c0_11 = arith.constant 0 : index
    %c0_12 = arith.constant 0 : index
    %24 = vector.load %arg4[%c0_11, %c0_12] : memref<1x128xf32, #tpu.memory_space<vmem>>, vector<1x128xf32>
    %cst_13 = arith.constant 9.99999974E-6 : f32
    %25 = vector.broadcast %cst_13 : f32 to vector<256x1xf32>
    %26 = arith.addf %23, %25 : vector<256x1xf32>
    %27 = math.rsqrt %26 : vector<256x1xf32>
    %28 = vector.broadcast %24 : vector<1x128xf32> to vector<256x128xf32>
    %29 = vector.broadcast %27 : vector<256x1xf32> to vector<256x128xf32>
    %30 = arith.mulf %28, %29 : vector<256x128xf32>
    %31 = vector.broadcast %14 : vector<256x1xf32> to vector<256x128xf32>
    %32 = arith.subf %5, %31 : vector<256x128xf32>
    %33 = arith.mulf %32, %30 : vector<256x128xf32>
    %c0_14 = arith.constant 0 : index
    %c0_15 = arith.constant 0 : index
    %34 = vector.load %arg5[%c0_14, %c0_15] : memref<1x128xf32, #tpu.memory_space<vmem>>, vector<1x128xf32>
    %35 = vector.broadcast %34 : vector<1x128xf32> to vector<256x128xf32>
    %36 = arith.addf %33, %35 : vector<256x128xf32>
    %c0_16 = arith.constant 0 : index
    %c0_17 = arith.constant 0 : index
    %37 = vector.load %arg6[%c0_16, %c0_17] : memref<256x128xf32, #tpu.memory_space<vmem>>, vector<256x128xf32>
    tpu.vector_store %arg6[%c0_16, %c0_17], %36 {strides = array<i32>} : memref<256x128xf32, #tpu.memory_space<vmem>>, vector<256x128xf32>,
    return
  }
  func.func @transform_0(%arg0: i32) -> (i32, i32) {
    %c0_i32 = arith.constant 0 : i32
    %c0_i32_0 = arith.constant 0 : i32
    return %arg0, %c0_i32 : i32, i32
  }
  func.func @transform_1(%arg0: i32) -> (i32, i32) {
    %c0_i32 = arith.constant 0 : i32
    %c0_i32_0 = arith.constant 0 : i32
    %c0_i32_1 = arith.constant 0 : i32
    return %c0_i32, %c0_i32_0 : i32, i32
  }
  func.func @transform_2(%arg0: i32) -> (i32, i32) {
    %c0_i32 = arith.constant 0 : i32
    %c0_i32_0 = arith.constant 0 : i32
    %c0_i32_1 = arith.constant 0 : i32
    return %c0_i32, %c0_i32_0 : i32, i32
  }
  func.func @transform_3(%arg0: i32) -> (i32, i32) {
    %c0_i32 = arith.constant 0 : i32
    %c0_i32_0 = arith.constant 0 : i32
    %c0_i32_1 = arith.constant 0 : i32
    return %c0_i32, %c0_i32_0 : i32, i32
  }
  func.func @transform_4(%arg0: i32) -> (i32, i32) {
    %c0_i32 = arith.constant 0 : i32
    %c0_i32_0 = arith.constant 0 : i32
    %c0_i32_1 = arith.constant 0 : i32
    return %c0_i32, %c0_i32_0 : i32, i32
  }
  func.func @transform_5(%arg0: i32) -> (i32, i32) {
    %c0_i32 = arith.constant 0 : i32
    %c0_i32_0 = arith.constant 0 : i32
    return %arg0, %c0_i32 : i32, i32
  }
}

</mosaic_0001>

<llo_original>
// kernel: overlap_patch_embed.1
$region0: #{overlap_patch_embed.1}
  #allocation0 [shape = 'u32[]', space=smem, size = 0x4, offset = 0x4, fixed_abs, tag = 'smem constant byte address 0x4 - core index']
  #allocation1 [shape = 'u32[144,128]{1,0:T(1,128)}', space=vmem, size = 0x12000, scoped, tag = 'internal scratch']
  %s0 = inlined_call_operand.vmem [shape: bf16[256,256], index: 0, kind: input, shape index: {}]
  %s1 = inlined_call_operand.vmem [shape: bf16[256,128], index: 1, kind: input, shape index: {}]
  %s2 = inlined_call_operand.vmem [shape: f32[1,128], index: 2, kind: input, shape index: {}]
  %s3 = inlined_call_operand.vmem [shape: f32[1,128], index: 3, kind: input, shape index: {}]
  %s4 = inlined_call_operand.vmem [shape: f32[1,128], index: 4, kind: input, shape index: {}]
  %s5 = inlined_call_operand.vmem [shape: f32[256,128], index: 5, kind: output, shape index: {}]
  %s6 = sld [smem:[#allocation0]]
  $region30: #{overlap_patch_embed.1} parent=0
    _
  %s8 = ssub.s32 1, %s6
  %s9 = scalar_select 0, %s8, %s6
  // Predicated region
  $region2: #{overlap_patch_embed.1} parent=0 // pred_check
    _
  $region3: #{overlap_patch_embed.1} parent=0 // pred_check_branch
    %11 = sbr.rel (0) target = $region5
  $region4: #{overlap_patch_embed.1} parent=0 // pred_region
    _
  $region5: #{overlap_patch_embed.1} parent=0 // pred_fallthru
    _
  // Predicated region
  $region6: #{overlap_patch_embed.1} parent=0 // pred_check
    _
  $region7: #{overlap_patch_embed.1} parent=0 // pred_check_branch
    %13 = sbr.rel (0) target = $region9
  $region8: #{overlap_patch_embed.1} parent=0 // pred_region
    _
  $region9: #{overlap_patch_embed.1} parent=0 // pred_fallthru
    _
  // Predicated region
  $region10: #{overlap_patch_embed.1} parent=0 // pred_check
    _
  $region11: #{overlap_patch_embed.1} parent=0 // pred_check_branch
    %15 = sbr.rel (0) target = $region13
  $region12: #{overlap_patch_embed.1} parent=0 // pred_region
    _
  $region13: #{overlap_patch_embed.1} parent=0 // pred_fallthru
    _
  // Predicated region
  $region14: #{overlap_patch_embed.1} parent=0 // pred_check
    _
  $region15: #{overlap_patch_embed.1} parent=0 // pred_check_branch
    %17 = sbr.rel (0) target = $region17
  $region16: #{overlap_patch_embed.1} parent=0 // pred_region
    _
  $region17: #{overlap_patch_embed.1} parent=0 // pred_fallthru
    _
  // Predicated region
  $region18: #{overlap_patch_embed.1} parent=0 // pred_check
    _
  $region19: #{overlap_patch_embed.1} parent=0 // pred_check_branch
    %19 = sbr.rel (0) target = $region21
  $region20: #{overlap_patch_embed.1} parent=0 // pred_region
    _
  $region21: #{overlap_patch_embed.1} parent=0 // pred_fallthru
    _
  %v21 = vld [vmem:[%s0] sm:$0xff]
  %v22 = vld [vmem:[%s0 + $0x8] sm:$0xff]
  %v23 = vld [vmem:[%s0 + $0x10] sm:$0xff]
  %v24 = vld [vmem:[%s0 + $0x18] sm:$0xff]
  %v25 = vld [vmem:[%s0 + $0x20] sm:$0xff]
  %v26 = vld [vmem:[%s0 + $0x28] sm:$0xff]
  %v27 = vld [vmem:[%s0 + $0x30] sm:$0xff]
  %v28 = vld [vmem:[%s0 + $0x38] sm:$0xff]
  %v29 = vld [vmem:[%s0 + $0x40] sm:$0xff]
  %v30 = vld [vmem:[%s0 + $0x48] sm:$0xff]
  %v31 = vld [vmem:[%s0 + $0x50] sm:$0xff]
  %v32 = vld [vmem:[%s0 + $0x58] sm:$0xff]
  %v33 = vld [vmem:[%s0 + $0x60] sm:$0xff]
  %v34 = vld [vmem:[%s0 + $0x68] sm:$0xff]
  %v35 = vld [vmem:[%s0 + $0x70] sm:$0xff]
  %v36 = vld [vmem:[%s0 + $0x78] sm:$0xff]
  %v37 = vld [vmem:[%s0 + $0x80] sm:$0xff]
  %v38 = vld [vmem:[%s0 + $0x88] sm:$0xff]
  %v39 = vld [vmem:[%s0 + $0x90] sm:$0xff]
  %v40 = vld [vmem:[%s0 + $0x98] sm:$0xff]
  %v41 = vld [vmem:[%s0 + $0xa0] sm:$0xff]
  %v42 = vld [vmem:[%s0 + $0xa8] sm:$0xff]
  %v43 = vld [vmem:[%s0 + $0xb0] sm:$0xff]
  %v44 = vld [vmem:[%s0 + $0xb8] sm:$0xff]
  %v45 = vld [vmem:[%s0 + $0xc0] sm:$0xff]
  %v46 = vld [vmem:[%s0 + $0xc8] sm:$0xff]
  %v47 = vld [vmem:[%s0 + $0xd0] sm:$0xff]
  %v48 = vld [vmem:[%s0 + $0xd8] sm:$0xff]
  %v49 = vld [vmem:[%s0 + $0xe0] sm:$0xff]
  %v50 = vld [vmem:[%s0 + $0xe8] sm:$0xff]
  %v51 = vld [vmem:[%s0 + $0xf0] sm:$0xff]
  %v52 = vld [vmem:[%s0 + $0xf8] sm:$0xff]
  %v53 = vld [vmem:[%s1] sm:$0xf]
  %v54 = vld [vmem:[%s1 + $0x4] sm:$0xf]
  %v55 = vld [vmem:[%s1 + $0x8] sm:$0xf]
  %v56 = vld [vmem:[%s1 + $0xc] sm:$0xf]
  %v57 = vld [vmem:[%s1 + $0x10] sm:$0xf]
  %v58 = vld [vmem:[%s1 + $0x14] sm:$0xf]
  %v59 = vld [vmem:[%s1 + $0x18] sm:$0xf]
  %v60 = vld [vmem:[%s1 + $0x1c] sm:$0xf]
  %v61 = vld [vmem:[%s1 + $0x20] sm:$0xf]
  %v62 = vld [vmem:[%s1 + $0x24] sm:$0xf]
  %v63 = vld [vmem:[%s1 + $0x28] sm:$0xf]
  %v64 = vld [vmem:[%s1 + $0x2c] sm:$0xf]
  %v65 = vld [vmem:[%s1 + $0x30] sm:$0xf]
  %v66 = vld [vmem:[%s1 + $0x34] sm:$0xf]
  %v67 = vld [vmem:[%s1 + $0x38] sm:$0xf]
  %v68 = vld [vmem:[%s1 + $0x3c] sm:$0xf]
  %v69 = vld [vmem:[%s1 + $0x40] sm:$0xf]
  %v70 = vld [vmem:[%s1 + $0x44] sm:$0xf]
  %v71 = vld [vmem:[%s1 + $0x48] sm:$0xf]
  %v72 = vld [vmem:[%s1 + $0x4c] sm:$0xf]
  %v73 = vld [vmem:[%s1 + $0x50] sm:$0xf]
  %v74 = vld [vmem:[%s1 + $0x54] sm:$0xf]
  %v75 = vld [vmem:[%s1 + $0x58] sm:$0xf]
  %v76 = vld [vmem:[%s1 + $0x5c] sm:$0xf]
  %v77 = vld [vmem:[%s1 + $0x60] sm:$0xf]
  %v78 = vld [vmem:[%s1 + $0x64] sm:$0xf]
  %v79 = vld [vmem:[%s1 + $0x68] sm:$0xf]
  %v80 = vld [vmem:[%s1 + $0x6c] sm:$0xf]
  %v81 = vld [vmem:[%s1 + $0x70] sm:$0xf]
  %v82 = vld [vmem:[%s1 + $0x74] sm:$0xf]
  %v83 = vld [vmem:[%s1 + $0x78] sm:$0xf]
  %v84 = vld [vmem:[%s1 + $0x7c] sm:$0xf]
  %v85 = vld [vmem:[%s2] sm:$0x1]
  %v87 = vlaneseq
  %v88 = vshrl.u32 %v87, 7
  %v89 = vsub.s32 0, %v88
  %v90 = vrot.slane %v85, %v89
  %v124 = vunpack.c.l.b16 %v21
  %v125 = vunpack.c.h.b16 %v21
  %v126 = vunpack.c.l.b16 %v22
  %v127 = vunpack.c.h.b16 %v22
  %v128 = vunpack.c.l.b16 %v23
  %v129 = vunpack.c.h.b16 %v23
  %v130 = vunpack.c.l.b16 %v24
  %v131 = vunpack.c.h.b16 %v24
  %v132 = vunpack.c.l.b16 %v25
  %v133 = vunpack.c.h.b16 %v25
  %v134 = vunpack.c.l.b16 %v26
  %v135 = vunpack.c.h.b16 %v26
  %v136 = vunpack.c.l.b16 %v27
  %v137 = vunpack.c.h.b16 %v27
  %v138 = vunpack.c.l.b16 %v28
  %v139 = vunpack.c.h.b16 %v28
  %v140 = vunpack.c.l.b16 %v29
  %v141 = vunpack.c.h.b16 %v29
  %v142 = vunpack.c.l.b16 %v30
  %v143 = vunpack.c.h.b16 %v30
  %v144 = vunpack.c.l.b16 %v31
  %v145 = vunpack.c.h.b16 %v31
  %v146 = vunpack.c.l.b16 %v32
  %v147 = vunpack.c.h.b16 %v32
  %v148 = vunpack.c.l.b16 %v33
  %v149 = vunpack.c.h.b16 %v33
  %v150 = vunpack.c.l.b16 %v34
  %v151 = vunpack.c.h.b16 %v34
  %v152 = vunpack.c.l.b16 %v35
  %v153 = vunpack.c.h.b16 %v35
  %v154 = vunpack.c.l.b16 %v36
  %v155 = vunpack.c.h.b16 %v36
  %v156 = vunpack.c.l.b16 %v37
  %v157 = vunpack.c.h.b16 %v37
  %v158 = vunpack.c.l.b16 %v38
  %v159 = vunpack.c.h.b16 %v38
  %v160 = vunpack.c.l.b16 %v39
  %v161 = vunpack.c.h.b16 %v39
  %v162 = vunpack.c.l.b16 %v40
  %v163 = vunpack.c.h.b16 %v40
  %v164 = vunpack.c.l.b16 %v41
  %v165 = vunpack.c.h.b16 %v41
  %v166 = vunpack.c.l.b16 %v42
  %v167 = vunpack.c.h.b16 %v42
  %v168 = vunpack.c.l.b16 %v43
  %v169 = vunpack.c.h.b16 %v43
  %v170 = vunpack.c.l.b16 %v44
  %v171 = vunpack.c.h.b16 %v44
  %v172 = vunpack.c.l.b16 %v45
  %v173 = vunpack.c.h.b16 %v45
  %v174 = vunpack.c.l.b16 %v46
  %v175 = vunpack.c.h.b16 %v46
  %v176 = vunpack.c.l.b16 %v47
  %v177 = vunpack.c.h.b16 %v47
  %v178 = vunpack.c.l.b16 %v48
  %v179 = vunpack.c.h.b16 %v48
  %v180 = vunpack.c.l.b16 %v49
  %v181 = vunpack.c.h.b16 %v49
  %v182 = vunpack.c.l.b16 %v50
  %v183 = vunpack.c.h.b16 %v50
  %v184 = vunpack.c.l.b16 %v51
  %v185 = vunpack.c.h.b16 %v51
  %v186 = vunpack.c.l.b16 %v52
  %v187 = vunpack.c.h.b16 %v52
  %v188 = vpack.c.b16 %v126, %v124
  %v189 = vpack.c.b16 %v127, %v125
  %v190 = vpack.c.b16 %v130, %v128
  %v191 = vpack.c.b16 %v131, %v129
  %v192 = vpack.c.b16 %v134, %v132
  %v193 = vpack.c.b16 %v135, %v133
  %v194 = vpack.c.b16 %v138, %v136
  %v195 = vpack.c.b16 %v139, %v137
  %v196 = vpack.c.b16 %v142, %v140
  %v197 = vpack.c.b16 %v143, %v141
  %v198 = vpack.c.b16 %v146, %v144
  %v199 = vpack.c.b16 %v147, %v145
  %v200 = vpack.c.b16 %v150, %v148
  %v201 = vpack.c.b16 %v151, %v149
  %v202 = vpack.c.b16 %v154, %v152
  %v203 = vpack.c.b16 %v155, %v153
  %v204 = vpack.c.b16 %v158, %v156
  %v205 = vpack.c.b16 %v159, %v157
  %v206 = vpack.c.b16 %v162, %v160
  %v207 = vpack.c.b16 %v163, %v161
  %v208 = vpack.c.b16 %v166, %v164
  %v209 = vpack.c.b16 %v167, %v165
  %v210 = vpack.c.b16 %v170, %v168
  %v211 = vpack.c.b16 %v171, %v169
  %v212 = vpack.c.b16 %v174, %v172
  %v213 = vpack.c.b16 %v175, %v173
  %v214 = vpack.c.b16 %v178, %v176
  %v215 = vpack.c.b16 %v179, %v177
  %v216 = vpack.c.b16 %v182, %v180
  %v217 = vpack.c.b16 %v183, %v181
  %v218 = vpack.c.b16 %v186, %v184
  %v219 = vpack.c.b16 %v187, %v185
  %v284 = vunpack.c.l.b16 %v53
  %v285 = vunpack.c.l.b16 %v54
  %v286 = vunpack.c.l.b16 %v55
  %v287 = vunpack.c.l.b16 %v56
  %v288 = vunpack.c.l.b16 %v57
  %v289 = vunpack.c.l.b16 %v58
  %v290 = vunpack.c.l.b16 %v59
  %v291 = vunpack.c.l.b16 %v60
  %v292 = vunpack.c.l.b16 %v61
  %v293 = vunpack.c.l.b16 %v62
  %v294 = vunpack.c.l.b16 %v63
  %v295 = vunpack.c.l.b16 %v64
  %v296 = vunpack.c.l.b16 %v65
  %v297 = vunpack.c.l.b16 %v66
  %v298 = vunpack.c.l.b16 %v67
  %v299 = vunpack.c.l.b16 %v68
  %v300 = vunpack.c.l.b16 %v69
  %v301 = vunpack.c.l.b16 %v70
  %v302 = vunpack.c.l.b16 %v71
  %v303 = vunpack.c.l.b16 %v72
  %v304 = vunpack.c.l.b16 %v73
  %v305 = vunpack.c.l.b16 %v74
  %v306 = vunpack.c.l.b16 %v75
  %v307 = vunpack.c.l.b16 %v76
  %v308 = vunpack.c.l.b16 %v77
  %v309 = vunpack.c.l.b16 %v78
  %v310 = vunpack.c.l.b16 %v79
  %v311 = vunpack.c.l.b16 %v80
  %v312 = vunpack.c.l.b16 %v81
  %v313 = vunpack.c.l.b16 %v82
  %v314 = vunpack.c.l.b16 %v83
  %v315 = vunpack.c.l.b16 %v84
  %v316 = vpack.c.b16 %v285, %v284
  %v317 = vpack.c.b16 %v287, %v286
  %v318 = vpack.c.b16 %v289, %v288
  %v319 = vpack.c.b16 %v291, %v290
  %v320 = vpack.c.b16 %v293, %v292
  %v321 = vpack.c.b16 %v295, %v294
  %v322 = vpack.c.b16 %v297, %v296
  %v323 = vpack.c.b16 %v299, %v298
  %v324 = vpack.c.b16 %v301, %v300
  %v325 = vpack.c.b16 %v303, %v302
  %v326 = vpack.c.b16 %v305, %v304
  %v327 = vpack.c.b16 %v307, %v306
  %v328 = vpack.c.b16 %v309, %v308
  %v329 = vpack.c.b16 %v311, %v310
  %v330 = vpack.c.b16 %v313, %v312
  %v331 = vpack.c.b16 %v315, %v314
  %348 = vmatprep.subr.bf16.mxu0 0
  %349 = vmatpush1.bf16.msra.mxu0 %v316
  %350 = vmatprep.subr.bf16.mxu0 0
  %351 = vmatpush1.bf16.msra.mxu0 %v317
  %352 = vmatprep.subr.bf16.mxu0 0
  %353 = vmatpush1.bf16.msra.mxu0 %v318
  %354 = vmatprep.subr.bf16.mxu0 0
  %355 = vmatpush1.bf16.msra.mxu0 %v319
  %356 = vmatprep.subr.bf16.mxu0 0
  %357 = vmatpush1.bf16.msra.mxu0 %v320
  %358 = vmatprep.subr.bf16.mxu0 0
  %359 = vmatpush1.bf16.msra.mxu0 %v321
  %360 = vmatprep.subr.bf16.mxu0 0
  %361 = vmatpush1.bf16.msra.mxu0 %v322
  %362 = vmatprep.subr.bf16.mxu0 0
  %363 = vmatpush1.bf16.msra.mxu0 %v323
  %364 = vmatprep.subr.bf16.mxu0 0
  %365 = vmatpush1.bf16.msra.mxu0 %v324
  %366 = vmatprep.subr.bf16.mxu0 0
  %367 = vmatpush1.bf16.msra.mxu0 %v325
  %368 = vmatprep.subr.bf16.mxu0 0
  %369 = vmatpush1.bf16.msra.mxu0 %v326
  %370 = vmatprep.subr.bf16.mxu0 0
  %371 = vmatpush1.bf16.msra.mxu0 %v327
  %372 = vmatprep.subr.bf16.mxu0 0
  %373 = vmatpush1.bf16.msra.mxu0 %v328
  %374 = vmatprep.subr.bf16.mxu0 0
  %375 = vmatpush1.bf16.msra.mxu0 %v329
  %376 = vmatprep.subr.bf16.mxu0 0
  %377 = vmatpush1.bf16.msra.mxu0 %v330
  %378 = vmatprep.subr.bf16.mxu0 0
  %379 = vmatpush1.bf16.msra.mxu0 %v331
  %380 = vmatprep.mubr.bf16.mxu0 %v189
  %381 = vmatmul.mubr.bf16.gmra.mrb[0].mxu0 %v188
  %v382 = vpop.f32.mrb[0].mxu0
  %v383 = vadd.f32 %v90, %v382
  %v384 = vpop.f32.mrb[0].mxu0
  %v385 = vpop.f32.mrb[0].mxu0
  %v386 = vadd.f32 %v90, %v385
  %v387 = vpop.f32.mrb[0].mxu0
  %388 = vmatprep.mubr.bf16.mxu0 %v191
  %389 = vmatmul.mubr.bf16.gmra.mrb[0].mxu0 %v190
  %v390 = vpop.f32.mrb[0].mxu0
  %v391 = vadd.f32 %v90, %v390
  %v392 = vpop.f32.mrb[0].mxu0
  %v393 = vpop.f32.mrb[0].mxu0
  %v394 = vadd.f32 %v90, %v393
  %v395 = vpop.f32.mrb[0].mxu0
  %396 = vmatprep.mubr.bf16.mxu0 %v193
  %397 = vmatmul.mubr.bf16.gmra.mrb[0].mxu0 %v192
  %v398 = vpop.f32.mrb[0].mxu0
  %v399 = vadd.f32 %v90, %v398
  %v400 = vpop.f32.mrb[0].mxu0
  %v401 = vpop.f32.mrb[0].mxu0
  %v402 = vadd.f32 %v90, %v401
  %v403 = vpop.f32.mrb[0].mxu0
  %404 = vmatprep.mubr.bf16.mxu0 %v195
  %405 = vmatmul.mubr.bf16.gmra.mrb[0].mxu0 %v194
  %v406 = vpop.f32.mrb[0].mxu0
  %v407 = vadd.f32 %v90, %v406
  %v408 = vpop.f32.mrb[0].mxu0
  %v409 = vpop.f32.mrb[0].mxu0
  %v410 = vadd.f32 %v90, %v409
  %v411 = vpop.f32.mrb[0].mxu0
  %412 = vmatprep.mubr.bf16.mxu0 %v197
  %413 = vmatmul.mubr.bf16.gmra.mrb[0].mxu0 %v196
  %v414 = vpop.f32.mrb[0].mxu0
  %v415 = vadd.f32 %v90, %v414
  %v416 = vpop.f32.mrb[0].mxu0
  %v417 = vpop.f32.mrb[0].mxu0
  %v418 = vadd.f32 %v90, %v417
  %v419 = vpop.f32.mrb[0].mxu0
  %420 = vmatprep.mubr.bf16.mxu0 %v199
  %421 = vmatmul.mubr.bf16.gmra.mrb[0].mxu0 %v198
  %v422 = vpop.f32.mrb[0].mxu0
  %v423 = vadd.f32 %v90, %v422
  %v424 = vpop.f32.mrb[0].mxu0
  %v425 = vpop.f32.mrb[0].mxu0
  %v426 = vadd.f32 %v90, %v425
  %v427 = vpop.f32.mrb[0].mxu0
  %428 = vmatprep.mubr.bf16.mxu0 %v201
  %429 = vmatmul.mubr.bf16.gmra.mrb[0].mxu0 %v200
  %v430 = vpop.f32.mrb[0].mxu0
  %v431 = vadd.f32 %v90, %v430
  %v432 = vpop.f32.mrb[0].mxu0
  %v433 = vpop.f32.mrb[0].mxu0
  %v434 = vadd.f32 %v90, %v433
  %v435 = vpop.f32.mrb[0].mxu0
  %436 = vmatprep.mubr.bf16.mxu0 %v203
  %437 = vmatmul.mubr.bf16.gmra.mrb[0].mxu0 %v202
  %v438 = vpop.f32.mrb[0].mxu0
  %v439 = vadd.f32 %v90, %v438
  %v440 = vpop.f32.mrb[0].mxu0
  %v441 = vpop.f32.mrb[0].mxu0
  %v442 = vadd.f32 %v90, %v441
  %v443 = vpop.f32.mrb[0].mxu0
  %444 = vmatprep.mubr.bf16.mxu0 %v205
  %445 = vmatmul.mubr.bf16.gmra.mrb[0].mxu0 %v204
  %v446 = vpop.f32.mrb[0].mxu0
  %v447 = vadd.f32 %v90, %v446
  %v448 = vpop.f32.mrb[0].mxu0
  %v449 = vpop.f32.mrb[0].mxu0
  %v450 = vadd.f32 %v90, %v449
  %v451 = vpop.f32.mrb[0].mxu0
  %452 = vmatprep.mubr.bf16.mxu0 %v207
  %453 = vmatmul.mubr.bf16.gmra.mrb[0].mxu0 %v206
  %v454 = vpop.f32.mrb[0].mxu0
  %v455 = vadd.f32 %v90, %v454
  %v456 = vpop.f32.mrb[0].mxu0
  %v457 = vpop.f32.mrb[0].mxu0
  %v458 = vadd.f32 %v90, %v457
  %v459 = vpop.f32.mrb[0].mxu0
  %460 = vmatprep.mubr.bf16.mxu0 %v209
  %461 = vmatmul.mubr.bf16.gmra.mrb[0].mxu0 %v208
  %v462 = vpop.f32.mrb[0].mxu0
  %v463 = vadd.f32 %v90, %v462
  %v464 = vpop.f32.mrb[0].mxu0
  %v465 = vpop.f32.mrb[0].mxu0
  %v466 = vadd.f32 %v90, %v465
  %v467 = vpop.f32.mrb[0].mxu0
  %468 = vmatprep.mubr.bf16.mxu0 %v211
  %469 = vmatmul.mubr.bf16.gmra.mrb[0].mxu0 %v210
  %v470 = vpop.f32.mrb[0].mxu0
  %v471 = vadd.f32 %v90, %v470
  %v472 = vpop.f32.mrb[0].mxu0
  %v473 = vpop.f32.mrb[0].mxu0
  %v474 = vadd.f32 %v90, %v473
  %v475 = vpop.f32.mrb[0].mxu0
  %476 = vmatprep.mubr.bf16.mxu0 %v213
  %477 = vmatmul.mubr.bf16.gmra.mrb[0].mxu0 %v212
  %v478 = vpop.f32.mrb[0].mxu0
  %v479 = vadd.f32 %v90, %v478
  %v480 = vpop.f32.mrb[0].mxu0
  %v481 = vpop.f32.mrb[0].mxu0
  %v482 = vadd.f32 %v90, %v481
  %v483 = vpop.f32.mrb[0].mxu0
  %484 = vmatprep.mubr.bf16.mxu0 %v215
  %485 = vmatmul.mubr.bf16.gmra.mrb[0].mxu0 %v214
  %v486 = vpop.f32.mrb[0].mxu0
  %v487 = vadd.f32 %v90, %v486
  %v488 = vpop.f32.mrb[0].mxu0
  %v489 = vpop.f32.mrb[0].mxu0
  %v490 = vadd.f32 %v90, %v489
  %v491 = vpop.f32.mrb[0].mxu0
  %492 = vmatprep.mubr.bf16.mxu0 %v217
  %493 = vmatmul.mubr.bf16.gmra.mrb[0].mxu0 %v216
  %v494 = vpop.f32.mrb[0].mxu0
  %v495 = vadd.f32 %v90, %v494
  %v496 = vpop.f32.mrb[0].mxu0
  %v497 = vpop.f32.mrb[0].mxu0
  %v498 = vadd.f32 %v90, %v497
  %v499 = vpop.f32.mrb[0].mxu0
  %500 = vmatprep.mubr.bf16.mxu0 %v219
  %501 = vmatmul.mubr.bf16.gmra.mrb[0].mxu0 %v218
  %v502 = vpop.f32.mrb[0].mxu0
  %v503 = vadd.f32 %v90, %v502
  %v504 = vpop.f32.mrb[0].mxu0
  %v505 = vpop.f32.mrb[0].mxu0
  %v506 = vadd.f32 %v90, %v505
  %v507 = vpop.f32.mrb[0].mxu0
  %508 = vdwg.mxu0
  %v509 = vlaneseq
  %v510 = vand.u32 %v509, 127
  %vm511 = vcmp.lt.s32.totalorder %v510, 32
  %v512 = vsel %vm511, %v383, 0.0
  %v513 = vsel %vm511, %v386, 0.0
  %v514 = vsel %vm511, %v391, 0.0
  %v515 = vsel %vm511, %v394, 0.0
  %v516 = vsel %vm511, %v399, 0.0
  %v517 = vsel %vm511, %v402, 0.0
  %v518 = vsel %vm511, %v407, 0.0
  %v519 = vsel %vm511, %v410, 0.0
  %v520 = vsel %vm511, %v415, 0.0
  %v521 = vsel %vm511, %v418, 0.0
  %v522 = vsel %vm511, %v423, 0.0
  %v523 = vsel %vm511, %v426, 0.0
  %v524 = vsel %vm511, %v431, 0.0
  %v525 = vsel %vm511, %v434, 0.0
  %v526 = vsel %vm511, %v439, 0.0
  %v527 = vsel %vm511, %v442, 0.0
  %v528 = vsel %vm511, %v447, 0.0
  %v529 = vsel %vm511, %v450, 0.0
  %v530 = vsel %vm511, %v455, 0.0
  %v531 = vsel %vm511, %v458, 0.0
  %v532 = vsel %vm511, %v463, 0.0
  %v533 = vsel %vm511, %v466, 0.0
  %v534 = vsel %vm511, %v471, 0.0
  %v535 = vsel %vm511, %v474, 0.0
  %v536 = vsel %vm511, %v479, 0.0
  %v537 = vsel %vm511, %v482, 0.0
  %v538 = vsel %vm511, %v487, 0.0
  %v539 = vsel %vm511, %v490, 0.0
  %v540 = vsel %vm511, %v495, 0.0
  %v541 = vsel %vm511, %v498, 0.0
  %v542 = vsel %vm511, %v503, 0.0
  %v543 = vsel %vm511, %v506, 0.0
  %544 = vadd.xlane.f32.xlu0 %v512
  %v545 = vpop.xlane.xlu0 %544
  %546 = vadd.xlane.f32.xlu0 %v513
  %v547 = vpop.xlane.xlu0 %546
  %548 = vadd.xlane.f32.xlu0 %v514
  %v549 = vpop.xlane.xlu0 %548
  %550 = vadd.xlane.f32.xlu0 %v515
  %v551 = vpop.xlane.xlu0 %550
  %552 = vadd.xlane.f32.xlu0 %v516
  %v553 = vpop.xlane.xlu0 %552
  %554 = vadd.xlane.f32.xlu0 %v517
  %v555 = vpop.xlane.xlu0 %554
  %556 = vadd.xlane.f32.xlu0 %v518
  %v557 = vpop.xlane.xlu0 %556
  %558 = vadd.xlane.f32.xlu0 %v519
  %v559 = vpop.xlane.xlu0 %558
  %560 = vadd.xlane.f32.xlu0 %v520
  %v561 = vpop.xlane.xlu0 %560
  %562 = vadd.xlane.f32.xlu0 %v521
  %v563 = vpop.xlane.xlu0 %562
  %564 = vadd.xlane.f32.xlu0 %v522
  %v565 = vpop.xlane.xlu0 %564
  %566 = vadd.xlane.f32.xlu0 %v523
  %v567 = vpop.xlane.xlu0 %566
  %568 = vadd.xlane.f32.xlu0 %v524
  %v569 = vpop.xlane.xlu0 %568
  %570 = vadd.xlane.f32.xlu0 %v525
  %v571 = vpop.xlane.xlu0 %570
  %572 = vadd.xlane.f32.xlu0 %v526
  %v573 = vpop.xlane.xlu0 %572
  %574 = vadd.xlane.f32.xlu0 %v527
  %v575 = vpop.xlane.xlu0 %574
  %576 = vadd.xlane.f32.xlu0 %v528
  %v577 = vpop.xlane.xlu0 %576
  %578 = vadd.xlane.f32.xlu0 %v529
  %v579 = vpop.xlane.xlu0 %578
  %580 = vadd.xlane.f32.xlu0 %v530
  %v581 = vpop.xlane.xlu0 %580
  %582 = vadd.xlane.f32.xlu0 %v531
  %v583 = vpop.xlane.xlu0 %582
  %584 = vadd.xlane.f32.xlu0 %v532
  %v585 = vpop.xlane.xlu0 %584
  %586 = vadd.xlane.f32.xlu0 %v533
  %v587 = vpop.xlane.xlu0 %586
  %588 = vadd.xlane.f32.xlu0 %v534
  %v589 = vpop.xlane.xlu0 %588
  %590 = vadd.xlane.f32.xlu0 %v535
  %v591 = vpop.xlane.xlu0 %590
  %592 = vadd.xlane.f32.xlu0 %v536
  %v593 = vpop.xlane.xlu0 %592
  %594 = vadd.xlane.f32.xlu0 %v537
  %v595 = vpop.xlane.xlu0 %594
  %596 = vadd.xlane.f32.xlu0 %v538
  %v597 = vpop.xlane.xlu0 %596
  %598 = vadd.xlane.f32.xlu0 %v539
  %v599 = vpop.xlane.xlu0 %598
  %600 = vadd.xlane.f32.xlu0 %v540
  %v601 = vpop.xlane.xlu0 %600
  %602 = vadd.xlane.f32.xlu0 %v541
  %v603 = vpop.xlane.xlu0 %602
  %604 = vadd.xlane.f32.xlu0 %v542
  %v605 = vpop.xlane.xlu0 %604
  %606 = vadd.xlane.f32.xlu0 %v543
  %v607 = vpop.xlane.xlu0 %606
  %v608 = vmul.f32 %v545, 0.03125
  %v609 = vmul.f32 %v547, 0.03125
  %v610 = vmul.f32 %v549, 0.03125
  %v611 = vmul.f32 %v551, 0.03125
  %v612 = vmul.f32 %v553, 0.03125
  %v613 = vmul.f32 %v555, 0.03125
  %v614 = vmul.f32 %v557, 0.03125
  %v615 = vmul.f32 %v559, 0.03125
  %v616 = vmul.f32 %v561, 0.03125
  %v617 = vmul.f32 %v563, 0.03125
  %v618 = vmul.f32 %v565, 0.03125
  %v619 = vmul.f32 %v567, 0.03125
  %v620 = vmul.f32 %v569, 0.03125
  %v621 = vmul.f32 %v571, 0.03125
  %v622 = vmul.f32 %v573, 0.03125
  %v623 = vmul.f32 %v575, 0.03125
  %v624 = vmul.f32 %v577, 0.03125
  %v625 = vmul.f32 %v579, 0.03125
  %v626 = vmul.f32 %v581, 0.03125
  %v627 = vmul.f32 %v583, 0.03125
  %v628 = vmul.f32 %v585, 0.03125
  %v629 = vmul.f32 %v587, 0.03125
  %v630 = vmul.f32 %v589, 0.03125
  %v631 = vmul.f32 %v591, 0.03125
  %v632 = vmul.f32 %v593, 0.03125
  %v633 = vmul.f32 %v595, 0.03125
  %v634 = vmul.f32 %v597, 0.03125
  %v635 = vmul.f32 %v599, 0.03125
  %v636 = vmul.f32 %v601, 0.03125
  %v637 = vmul.f32 %v603, 0.03125
  %v638 = vmul.f32 %v605, 0.03125
  %v639 = vmul.f32 %v607, 0.03125
  %v640 = vsub.f32 %v383, %v608
  %v641 = vsub.f32 %v386, %v609
  %v642 = vsub.f32 %v391, %v610
  %v643 = vsub.f32 %v394, %v611
  %v644 = vsub.f32 %v399, %v612
  %v645 = vsub.f32 %v402, %v613
  %v646 = vsub.f32 %v407, %v614
  %v647 = vsub.f32 %v410, %v615
  %v648 = vsub.f32 %v415, %v616
  %v649 = vsub.f32 %v418, %v617
  %v650 = vsub.f32 %v423, %v618
  %v651 = vsub.f32 %v426, %v619
  %v652 = vsub.f32 %v431, %v620
  %v653 = vsub.f32 %v434, %v621
  %v654 = vsub.f32 %v439, %v622
  %v655 = vsub.f32 %v442, %v623
  %v656 = vsub.f32 %v447, %v624
  %v657 = vsub.f32 %v450, %v625
  %v658 = vsub.f32 %v455, %v626
  %v659 = vsub.f32 %v458, %v627
  %v660 = vsub.f32 %v463, %v628
  %v661 = vsub.f32 %v466, %v629
  %v662 = vsub.f32 %v471, %v630
  %v663 = vsub.f32 %v474, %v631
  %v664 = vsub.f32 %v479, %v632
  %v665 = vsub.f32 %v482, %v633
  %v666 = vsub.f32 %v487, %v634
  %v667 = vsub.f32 %v490, %v635
  %v668 = vsub.f32 %v495, %v636
  %v669 = vsub.f32 %v498, %v637
  %v670 = vsub.f32 %v503, %v638
  %v671 = vsub.f32 %v506, %v639
  %v672 = vsel %vm511, %v640, 0.0
  %v673 = vsel %vm511, %v641, 0.0
  %v674 = vsel %vm511, %v642, 0.0
  %v675 = vsel %vm511, %v643, 0.0
  %v676 = vsel %vm511, %v644, 0.0
  %v677 = vsel %vm511, %v645, 0.0
  %v678 = vsel %vm511, %v646, 0.0
  %v679 = vsel %vm511, %v647, 0.0
  %v680 = vsel %vm511, %v648, 0.0
  %v681 = vsel %vm511, %v649, 0.0
  %v682 = vsel %vm511, %v650, 0.0
  %v683 = vsel %vm511, %v651, 0.0
  %v684 = vsel %vm511, %v652, 0.0
  %v685 = vsel %vm511, %v653, 0.0
  %v686 = vsel %vm511, %v654, 0.0
  %v687 = vsel %vm511, %v655, 0.0
  %v688 = vsel %vm511, %v656, 0.0
  %v689 = vsel %vm511, %v657, 0.0
  %v690 = vsel %vm511, %v658, 0.0
  %v691 = vsel %vm511, %v659, 0.0
  %v692 = vsel %vm511, %v660, 0.0
  %v693 = vsel %vm511, %v661, 0.0
  %v694 = vsel %vm511, %v662, 0.0
  %v695 = vsel %vm511, %v663, 0.0
  %v696 = vsel %vm511, %v664, 0.0
  %v697 = vsel %vm511, %v665, 0.0
  %v698 = vsel %vm511, %v666, 0.0
  %v699 = vsel %vm511, %v667, 0.0
  %v700 = vsel %vm511, %v668, 0.0
  %v701 = vsel %vm511, %v669, 0.0
  %v702 = vsel %vm511, %v670, 0.0
  %v703 = vsel %vm511, %v671, 0.0
  %v704 = vmul.f32 %v672, %v672
  %v705 = vmul.f32 %v673, %v673
  %v706 = vmul.f32 %v674, %v674
  %v707 = vmul.f32 %v675, %v675
  %v708 = vmul.f32 %v676, %v676
  %v709 = vmul.f32 %v677, %v677
  %v710 = vmul.f32 %v678, %v678
  %v711 = vmul.f32 %v679, %v679
  %v712 = vmul.f32 %v680, %v680
  %v713 = vmul.f32 %v681, %v681
  %v714 = vmul.f32 %v682, %v682
  %v715 = vmul.f32 %v683, %v683
  %v716 = vmul.f32 %v684, %v684
  %v717 = vmul.f32 %v685, %v685
  %v718 = vmul.f32 %v686, %v686
  %v719 = vmul.f32 %v687, %v687
  %v720 = vmul.f32 %v688, %v688
  %v721 = vmul.f32 %v689, %v689
  %v722 = vmul.f32 %v690, %v690
  %v723 = vmul.f32 %v691, %v691
  %v724 = vmul.f32 %v692, %v692
  %v725 = vmul.f32 %v693, %v693
  %v726 = vmul.f32 %v694, %v694
  %v727 = vmul.f32 %v695, %v695
  %v728 = vmul.f32 %v696, %v696
  %v729 = vmul.f32 %v697, %v697
  %v730 = vmul.f32 %v698, %v698
  %v731 = vmul.f32 %v699, %v699
  %v732 = vmul.f32 %v700, %v700
  %v733 = vmul.f32 %v701, %v701
  %v734 = vmul.f32 %v702, %v702
  %v735 = vmul.f32 %v703, %v703
  %736 = vadd.xlane.f32.xlu0 %v704
  %v737 = vpop.xlane.xlu0 %736
  %738 = vadd.xlane.f32.xlu0 %v705
  %v739 = vpop.xlane.xlu0 %738
  %740 = vadd.xlane.f32.xlu0 %v706
  %v741 = vpop.xlane.xlu0 %740
  %742 = vadd.xlane.f32.xlu0 %v707
  %v743 = vpop.xlane.xlu0 %742
  %744 = vadd.xlane.f32.xlu0 %v708
  %v745 = vpop.xlane.xlu0 %744
  %746 = vadd.xlane.f32.xlu0 %v709
  %v747 = vpop.xlane.xlu0 %746
  %748 = vadd.xlane.f32.xlu0 %v710
  %v749 = vpop.xlane.xlu0 %748
  %750 = vadd.xlane.f32.xlu0 %v711
  %v751 = vpop.xlane.xlu0 %750
  %752 = vadd.xlane.f32.xlu0 %v712
  %v753 = vpop.xlane.xlu0 %752
  %754 = vadd.xlane.f32.xlu0 %v713
  %v755 = vpop.xlane.xlu0 %754
  %756 = vadd.xlane.f32.xlu0 %v714
  %v757 = vpop.xlane.xlu0 %756
  %758 = vadd.xlane.f32.xlu0 %v715
  %v759 = vpop.xlane.xlu0 %758
  %760 = vadd.xlane.f32.xlu0 %v716
  %v761 = vpop.xlane.xlu0 %760
  %762 = vadd.xlane.f32.xlu0 %v717
  %v763 = vpop.xlane.xlu0 %762
  %764 = vadd.xlane.f32.xlu0 %v718
  %v765 = vpop.xlane.xlu0 %764
  %766 = vadd.xlane.f32.xlu0 %v719
  %v767 = vpop.xlane.xlu0 %766
  %768 = vadd.xlane.f32.xlu0 %v720
  %v769 = vpop.xlane.xlu0 %768
  %770 = vadd.xlane.f32.xlu0 %v721
  %v771 = vpop.xlane.xlu0 %770
  %772 = vadd.xlane.f32.xlu0 %v722
  %v773 = vpop.xlane.xlu0 %772
  %774 = vadd.xlane.f32.xlu0 %v723
  %v775 = vpop.xlane.xlu0 %774
  %776 = vadd.xlane.f32.xlu0 %v724
  %v777 = vpop.xlane.xlu0 %776
  %778 = vadd.xlane.f32.xlu0 %v725
  %v779 = vpop.xlane.xlu0 %778
  %780 = vadd.xlane.f32.xlu0 %v726
  %v781 = vpop.xlane.xlu0 %780
  %782 = vadd.xlane.f32.xlu0 %v727
  %v783 = vpop.xlane.xlu0 %782
  %784 = vadd.xlane.f32.xlu0 %v728
  %v785 = vpop.xlane.xlu0 %784
  %786 = vadd.xlane.f32.xlu0 %v729
  %v787 = vpop.xlane.xlu0 %786
  %788 = vadd.xlane.f32.xlu0 %v730
  %v789 = vpop.xlane.xlu0 %788
  %790 = vadd.xlane.f32.xlu0 %v731
  %v791 = vpop.xlane.xlu0 %790
  %792 = vadd.xlane.f32.xlu0 %v732
  %v793 = vpop.xlane.xlu0 %792
  %794 = vadd.xlane.f32.xlu0 %v733
  %v795 = vpop.xlane.xlu0 %794
  %796 = vadd.xlane.f32.xlu0 %v734
  %v797 = vpop.xlane.xlu0 %796
  %798 = vadd.xlane.f32.xlu0 %v735
  %v799 = vpop.xlane.xlu0 %798
  %v800 = vmul.f32 %v737, 0.03125
  %v801 = vmul.f32 %v739, 0.03125
  %v802 = vmul.f32 %v741, 0.03125
  %v803 = vmul.f32 %v743, 0.03125
  %v804 = vmul.f32 %v745, 0.03125
  %v805 = vmul.f32 %v747, 0.03125
  %v806 = vmul.f32 %v749, 0.03125
  %v807 = vmul.f32 %v751, 0.03125
  %v808 = vmul.f32 %v753, 0.03125
  %v809 = vmul.f32 %v755, 0.03125
  %v810 = vmul.f32 %v757, 0.03125
  %v811 = vmul.f32 %v759, 0.03125
  %v812 = vmul.f32 %v761, 0.03125
  %v813 = vmul.f32 %v763, 0.03125
  %v814 = vmul.f32 %v765, 0.03125
  %v815 = vmul.f32 %v767, 0.03125
  %v816 = vmul.f32 %v769, 0.03125
  %v817 = vmul.f32 %v771, 0.03125
  %v818 = vmul.f32 %v773, 0.03125
  %v819 = vmul.f32 %v775, 0.03125
  %v820 = vmul.f32 %v777, 0.03125
  %v821 = vmul.f32 %v779, 0.03125
  %v822 = vmul.f32 %v781, 0.03125
  %v823 = vmul.f32 %v783, 0.03125
  %v824 = vmul.f32 %v785, 0.03125
  %v825 = vmul.f32 %v787, 0.03125
  %v826 = vmul.f32 %v789, 0.03125
  %v827 = vmul.f32 %v791, 0.03125
  %v828 = vmul.f32 %v793, 0.03125
  %v829 = vmul.f32 %v795, 0.03125
  %v830 = vmul.f32 %v797, 0.03125
  %v831 = vmul.f32 %v799, 0.03125
  %v832 = vld [vmem:[%s3] sm:$0x1]
  %v833 = vadd.f32 %v800, 1e-05
  %v834 = vadd.f32 %v801, 1e-05
  %v835 = vadd.f32 %v802, 1e-05
  %v836 = vadd.f32 %v803, 1e-05
  %v837 = vadd.f32 %v804, 1e-05
  %v838 = vadd.f32 %v805, 1e-05
  %v839 = vadd.f32 %v806, 1e-05
  %v840 = vadd.f32 %v807, 1e-05
  %v841 = vadd.f32 %v808, 1e-05
  %v842 = vadd.f32 %v809, 1e-05
  %v843 = vadd.f32 %v810, 1e-05
  %v844 = vadd.f32 %v811, 1e-05
  %v845 = vadd.f32 %v812, 1e-05
  %v846 = vadd.f32 %v813, 1e-05
  %v847 = vadd.f32 %v814, 1e-05
  %v848 = vadd.f32 %v815, 1e-05
  %v849 = vadd.f32 %v816, 1e-05
  %v850 = vadd.f32 %v817, 1e-05
  %v851 = vadd.f32 %v818, 1e-05
  %v852 = vadd.f32 %v819, 1e-05
  %v853 = vadd.f32 %v820, 1e-05
  %v854 = vadd.f32 %v821, 1e-05
  %v855 = vadd.f32 %v822, 1e-05
  %v856 = vadd.f32 %v823, 1e-05
  %v857 = vadd.f32 %v824, 1e-05
  %v858 = vadd.f32 %v825, 1e-05
  %v859 = vadd.f32 %v826, 1e-05
  %v860 = vadd.f32 %v827, 1e-05
  %v861 = vadd.f32 %v828, 1e-05
  %v862 = vadd.f32 %v829, 1e-05
  %v863 = vadd.f32 %v830, 1e-05
  %v864 = vadd.f32 %v831, 1e-05
  %v865 = vrsqrt.pop %v833
  %v866 = vrsqrt.pop %v834
  %v867 = vrsqrt.pop %v835
  %v868 = vrsqrt.pop %v836
  %v869 = vrsqrt.pop %v837
  %v870 = vrsqrt.pop %v838
  %v871 = vrsqrt.pop %v839
  %v872 = vrsqrt.pop %v840
  %v873 = vrsqrt.pop %v841
  %v874 = vrsqrt.pop %v842
  %v875 = vrsqrt.pop %v843
  %v876 = vrsqrt.pop %v844
  %v877 = vrsqrt.pop %v845
  %v878 = vrsqrt.pop %v846
  %v879 = vrsqrt.pop %v847
  %v880 = vrsqrt.pop %v848
  %v881 = vrsqrt.pop %v849
  %v882 = vrsqrt.pop %v850
  %v883 = vrsqrt.pop %v851
  %v884 = vrsqrt.pop %v852
  %v885 = vrsqrt.pop %v853
  %v886 = vrsqrt.pop %v854
  %v887 = vrsqrt.pop %v855
  %v888 = vrsqrt.pop %v856
  %v889 = vrsqrt.pop %v857
  %v890 = vrsqrt.pop %v858
  %v891 = vrsqrt.pop %v859
  %v892 = vrsqrt.pop %v860
  %v893 = vrsqrt.pop %v861
  %v894 = vrsqrt.pop %v862
  %v895 = vrsqrt.pop %v863
  %v896 = vrsqrt.pop %v864
  %v898 = vlaneseq
  %v899 = vshrl.u32 %v898, 7
  %v900 = vsub.s32 0, %v899
  %v901 = vrot.slane %v832, %v900
  %v903 = vmul.f32 %v901, %v865
  %v904 = vmul.f32 %v901, %v866
  %v905 = vmul.f32 %v901, %v867
  %v906 = vmul.f32 %v901, %v868
  %v907 = vmul.f32 %v901, %v869
  %v908 = vmul.f32 %v901, %v870
  %v909 = vmul.f32 %v901, %v871
  %v910 = vmul.f32 %v901, %v872
  %v911 = vmul.f32 %v901, %v873
  %v912 = vmul.f32 %v901, %v874
  %v913 = vmul.f32 %v901, %v875
  %v914 = vmul.f32 %v901, %v876
  %v915 = vmul.f32 %v901, %v877
  %v916 = vmul.f32 %v901, %v878
  %v917 = vmul.f32 %v901, %v879
  %v918 = vmul.f32 %v901, %v880
  %v919 = vmul.f32 %v901, %v881
  %v920 = vmul.f32 %v901, %v882
  %v921 = vmul.f32 %v901, %v883
  %v922 = vmul.f32 %v901, %v884
  %v923 = vmul.f32 %v901, %v885
  %v924 = vmul.f32 %v901, %v886
  %v925 = vmul.f32 %v901, %v887
  %v926 = vmul.f32 %v901, %v888
  %v927 = vmul.f32 %v901, %v889
  %v928 = vmul.f32 %v901, %v890
  %v929 = vmul.f32 %v901, %v891
  %v930 = vmul.f32 %v901, %v892
  %v931 = vmul.f32 %v901, %v893
  %v932 = vmul.f32 %v901, %v894
  %v933 = vmul.f32 %v901, %v895
  %v934 = vmul.f32 %v901, %v896
  %v935 = vmul.f32 %v640, %v903
  %v936 = vmul.f32 %v641, %v904
  %v937 = vmul.f32 %v642, %v905
  %v938 = vmul.f32 %v643, %v906
  %v939 = vmul.f32 %v644, %v907
  %v940 = vmul.f32 %v645, %v908
  %v941 = vmul.f32 %v646, %v909
  %v942 = vmul.f32 %v647, %v910
  %v943 = vmul.f32 %v648, %v911
  %v944 = vmul.f32 %v649, %v912
  %v945 = vmul.f32 %v650, %v913
  %v946 = vmul.f32 %v651, %v914
  %v947 = vmul.f32 %v652, %v915
  %v948 = vmul.f32 %v653, %v916
  %v949 = vmul.f32 %v654, %v917
  %v950 = vmul.f32 %v655, %v918
  %v951 = vmul.f32 %v656, %v919
  %v952 = vmul.f32 %v657, %v920
  %v953 = vmul.f32 %v658, %v921
  %v954 = vmul.f32 %v659, %v922
  %v955 = vmul.f32 %v660, %v923
  %v956 = vmul.f32 %v661, %v924
  %v957 = vmul.f32 %v662, %v925
  %v958 = vmul.f32 %v663, %v926
  %v959 = vmul.f32 %v664, %v927
  %v960 = vmul.f32 %v665, %v928
  %v961 = vmul.f32 %v666, %v929
  %v962 = vmul.f32 %v667, %v930
  %v963 = vmul.f32 %v668, %v931
  %v964 = vmul.f32 %v669, %v932
  %v965 = vmul.f32 %v670, %v933
  %v966 = vmul.f32 %v671, %v934
  %v967 = vld [vmem:[%s4] sm:$0x1]
  %v969 = vlaneseq
  %v970 = vshrl.u32 %v969, 7
  %v971 = vsub.s32 0, %v970
  %v972 = vrot.slane %v967, %v971
  %v974 = vadd.f32 %v935, %v972
  %v975 = vadd.f32 %v936, %v972
  %v976 = vadd.f32 %v937, %v972
  %v977 = vadd.f32 %v938, %v972
  %v978 = vadd.f32 %v939, %v972
  %v979 = vadd.f32 %v940, %v972
  %v980 = vadd.f32 %v941, %v972
  %v981 = vadd.f32 %v942, %v972
  %v982 = vadd.f32 %v943, %v972
  %v983 = vadd.f32 %v944, %v972
  %v984 = vadd.f32 %v945, %v972
  %v985 = vadd.f32 %v946, %v972
  %v986 = vadd.f32 %v947, %v972
  %v987 = vadd.f32 %v948, %v972
  %v988 = vadd.f32 %v949, %v972
  %v989 = vadd.f32 %v950, %v972
  %v990 = vadd.f32 %v951, %v972
  %v991 = vadd.f32 %v952, %v972
  %v992 = vadd.f32 %v953, %v972
  %v993 = vadd.f32 %v954, %v972
  %v994 = vadd.f32 %v955, %v972
  %v995 = vadd.f32 %v956, %v972
  %v996 = vadd.f32 %v957, %v972
  %v997 = vadd.f32 %v958, %v972
  %v998 = vadd.f32 %v959, %v972
  %v999 = vadd.f32 %v960, %v972
  %v1000 = vadd.f32 %v961, %v972
  %v1001 = vadd.f32 %v962, %v972
  %v1002 = vadd.f32 %v963, %v972
  %v1003 = vadd.f32 %v964, %v972
  %v1004 = vadd.f32 %v965, %v972
  %v1005 = vadd.f32 %v966, %v972
  %1006 = vst [vmem:[%s5] sm:$0xff] %v974
  %1007 = vst [vmem:[%s5 + $0x8] sm:$0xff] %v975
  %1008 = vst [vmem:[%s5 + $0x10] sm:$0xff] %v976
  %1009 = vst [vmem:[%s5 + $0x18] sm:$0xff] %v977
  %1010 = vst [vmem:[%s5 + $0x20] sm:$0xff] %v978
  %1011 = vst [vmem:[%s5 + $0x28] sm:$0xff] %v979
  %1012 = vst [vmem:[%s5 + $0x30] sm:$0xff] %v980
  %1013 = vst [vmem:[%s5 + $0x38] sm:$0xff] %v981
  %1014 = vst [vmem:[%s5 + $0x40] sm:$0xff] %v982
  %1015 = vst [vmem:[%s5 + $0x48] sm:$0xff] %v983
  %1016 = vst [vmem:[%s5 + $0x50] sm:$0xff] %v984
  %1017 = vst [vmem:[%s5 + $0x58] sm:$0xff] %v985
  %1018 = vst [vmem:[%s5 + $0x60] sm:$0xff] %v986
  %1019 = vst [vmem:[%s5 + $0x68] sm:$0xff] %v987
  %1020 = vst [vmem:[%s5 + $0x70] sm:$0xff] %v988
  %1021 = vst [vmem:[%s5 + $0x78] sm:$0xff] %v989
  %1022 = vst [vmem:[%s5 + $0x80] sm:$0xff] %v990
  %1023 = vst [vmem:[%s5 + $0x88] sm:$0xff] %v991
  %1024 = vst [vmem:[%s5 + $0x90] sm:$0xff] %v992
  %1025 = vst [vmem:[%s5 + $0x98] sm:$0xff] %v993
  %1026 = vst [vmem:[%s5 + $0xa0] sm:$0xff] %v994
  %1027 = vst [vmem:[%s5 + $0xa8] sm:$0xff] %v995
  %1028 = vst [vmem:[%s5 + $0xb0] sm:$0xff] %v996
  %1029 = vst [vmem:[%s5 + $0xb8] sm:$0xff] %v997
  %1030 = vst [vmem:[%s5 + $0xc0] sm:$0xff] %v998
  %1031 = vst [vmem:[%s5 + $0xc8] sm:$0xff] %v999
  %1032 = vst [vmem:[%s5 + $0xd0] sm:$0xff] %v1000
  %1033 = vst [vmem:[%s5 + $0xd8] sm:$0xff] %v1001
  %1034 = vst [vmem:[%s5 + $0xe0] sm:$0xff] %v1002
  %1035 = vst [vmem:[%s5 + $0xe8] sm:$0xff] %v1003
  %1036 = vst [vmem:[%s5 + $0xf0] sm:$0xff] %v1004
  %1037 = vst [vmem:[%s5 + $0xf8] sm:$0xff] %v1005
  // Predicated region
  $region22: #{overlap_patch_embed.1} parent=0 // pred_check
    _
  $region23: #{overlap_patch_embed.1} parent=0 // pred_check_branch
    %1039 = sbr.rel (0) target = $region25
  $region24: #{overlap_patch_embed.1} parent=0 // pred_region
    _
  $region25: #{overlap_patch_embed.1} parent=0 // pred_fallthru
    _
  // Predicated region
  $region26: #{overlap_patch_embed.1} parent=0 // pred_check
    _
  $region27: #{overlap_patch_embed.1} parent=0 // pred_check_branch
    %1041 = sbr.rel (0) target = $region29
  $region28: #{overlap_patch_embed.1} parent=0 // pred_region
    _
  $region29: #{overlap_patch_embed.1} parent=0 // pred_fallthru
    _

</llo_original>
